<compile_context>
chip_gen: v6e
topology: v6e:2x2x1
jax: 0.10.0
libtpu: 0.0.40
codegen_flags: <defaults>
</compile_context>

<pallas_src>
import jax
import jax.numpy as jnp
from jax.experimental import pallas as pl
from jax.experimental.pallas import tpu as pltpu

HIDDEN_SIZE = 256
LANE = 128      # TPU lane width: output feature dim is padded up to this
SUBLANE = 8     # f32 sublane granularity: batch tiles are multiples of this


def _round_up(x, m):
    return ((x + m - 1) // m) * m


def mlp_kernel(x_ref, w1_ref, b1_ref, w2_ref, b2_ref, w3_ref, b3_ref, o_ref):
    # Layer 1: bf16 matmul, f32 accumulate; bias + ReLU in f32.
    h = jnp.dot(x_ref[...], w1_ref[...], preferred_element_type=jnp.float32)
    h = jnp.maximum(h + b1_ref[...], 0.0)
    # Layer 2: cast activations back to bf16 to feed the MXU.
    h = jnp.dot(h.astype(jnp.bfloat16), w2_ref[...],
                preferred_element_type=jnp.float32)
    h = jnp.maximum(h + b2_ref[...], 0.0)
    # Output layer (feature dim padded to LANE for lane-dense stores).
    out = jnp.dot(h.astype(jnp.bfloat16), w3_ref[...],
                  preferred_element_type=jnp.float32)
    o_ref[...] = (out + b3_ref[...]).astype(o_ref.dtype)


def mlp_forward(x, w1, b1, w2, b2, w3, b3, *, batch_tile=256):
    """Full 3-layer MLP in one Pallas kernel, tiled (in parallel) over batch."""
    B, in_dim = x.shape
    out_dim = w3.shape[1]

    # ---- choose batch tile & pad the batch (no divisibility requirement) ----
    tile = min(batch_tile, _round_up(B, SUBLANE))
    tile = _round_up(tile, SUBLANE)
    Bp = _round_up(B, tile)
    if Bp != B:
        x = jnp.pad(x, ((0, Bp - B), (0, 0)))
    grid = (Bp // tile,)

    # ---- pad output features to a lane-dense width --------------------------
    out_pad = _round_up(out_dim, LANE)
    if out_pad != out_dim:
        w3 = jnp.pad(w3, ((0, 0), (0, out_pad - out_dim)))
        b3 = jnp.pad(b3, ((0, 0), (0, out_pad - out_dim)))

    # ---- bf16 MXU inputs, f32 biases/accumulators ---------------------------
    x_bf = x.astype(jnp.bfloat16)
    w1_bf, w2_bf, w3_bf = (w.astype(jnp.bfloat16) for w in (w1, w2, w3))
    b1_f, b2_f, b3_f = (b.astype(jnp.float32) for b in (b1, b2, b3))

    full = lambda i: (0, 0)  # parameters are resident: constant block index

    flops = 2 * Bp * (in_dim * HIDDEN_SIZE
                      + HIDDEN_SIZE * HIDDEN_SIZE
                      + HIDDEN_SIZE * out_pad)
    bytes_accessed = (
        x_bf.size * 2
        + (w1_bf.size + w2_bf.size + w3_bf.size) * 2
        + (b1_f.size + b2_f.size + b3_f.size) * 4
        + Bp * out_pad * 4
    )

    out_padded = pl.pallas_call(
        mlp_kernel,
        out_shape=jax.ShapeDtypeStruct((Bp, out_pad), jnp.float32),
        grid_spec=pltpu.PrefetchScalarGridSpec(
            num_scalar_prefetch=0,
            grid=grid,
            in_specs=[
                pl.BlockSpec((tile, in_dim), lambda i: (i, 0)),      # x tile
                pl.BlockSpec((in_dim, HIDDEN_SIZE), full),           # w1
                pl.BlockSpec((1, HIDDEN_SIZE), full),                # b1
                pl.BlockSpec((HIDDEN_SIZE, HIDDEN_SIZE), full),      # w2
                pl.BlockSpec((1, HIDDEN_SIZE), full),                # b2
                pl.BlockSpec((HIDDEN_SIZE, out_pad), full),          # w3 (padded)
                pl.BlockSpec((1, out_pad), full),                    # b3 (padded)
            ],
            out_specs=pl.BlockSpec((tile, out_pad), lambda i: (i, 0)),
        ),
        compiler_params=pltpu.CompilerParams(
            dimension_semantics=("parallel",),
        ),
        cost_estimate=pl.CostEstimate(
            flops=flops, transcendentals=0, bytes_accessed=bytes_accessed),
    )(x_bf, w1_bf, b1_f, w2_bf, b2_f, w3_bf, b3_f)

    # Strip batch padding and the lane padding of the output features.
    return out_padded[:B, :out_dim]


def init_linear_params(key, fan_in, fan_out, dtype=jnp.float32):
    """Matches torch.nn.Linear default init: U(-1/sqrt(fan_in), 1/sqrt(fan_in)).
    Weight stored pre-transposed as (fan_in, fan_out)."""
    kw, kb = jax.random.split(key)
    bound = 1.0 / jnp.sqrt(jnp.asarray(fan_in, dtype))
    w = jax.random.uniform(kw, (fan_in, fan_out), dtype, -bound, bound)
    b = jax.random.uniform(kb, (1, fan_out), dtype, -bound, bound)
    return w, b


def init_critic_params(key, state_dim, action_dim):
    k1, k2, k3 = jax.random.split(key, 3)
    in_dim = state_dim + action_dim
    w1, b1 = init_linear_params(k1, in_dim, HIDDEN_SIZE)
    w2, b2 = init_linear_params(k2, HIDDEN_SIZE, HIDDEN_SIZE)
    w3, b3 = init_linear_params(k3, HIDDEN_SIZE, 1)
    return (w1, b1, w2, b2, w3, b3)


def critic_forward(state, action, params, *, batch_tile=256):
    # torch.cat([state, action], 1) done in the wrapper; MLP runs in one kernel.
    x = jnp.concatenate([state, action], axis=1)
    return mlp_forward(x, *params, batch_tile=batch_tile)


def critic_reference(state, action, params):
    """Pure-JAX reference mirroring the kernel's bf16-matmul / f32-acc numerics."""
    w1, b1, w2, b2, w3, b3 = params
    x = jnp.concatenate([state, action], axis=1).astype(jnp.bfloat16)
    h = jnp.dot(x, w1.astype(jnp.bfloat16), preferred_element_type=jnp.float32)
    h = jnp.maximum(h + b1, 0.0)
    h = jnp.dot(h.astype(jnp.bfloat16), w2.astype(jnp.bfloat16),
                preferred_element_type=jnp.float32)
    h = jnp.maximum(h + b2, 0.0)
    out = jnp.dot(h.astype(jnp.bfloat16), w3.astype(jnp.bfloat16),
                  preferred_element_type=jnp.float32)
    return out + b3


if __name__ == "__main__":
    # Small, Ant-like critic shapes: state_dim=24, action_dim=8, batch=64.
    STATE_DIM, ACTION_DIM, B = 24, 8, 64

    key = jax.random.PRNGKey(0)
    ks, ka, kp = jax.random.split(key, 3)
    state = jax.random.normal(ks, (B, STATE_DIM), jnp.float32)
    action = jax.random.normal(ka, (B, ACTION_DIM), jnp.float32)
    params = init_critic_params(kp, STATE_DIM, ACTION_DIM)

    out = critic_forward(state, action, params)
    out = jax.block_until_ready(out)

    ref = critic_reference(state, action, params)
    assert out.shape == (B, 1), out.shape
    assert jnp.allclose(out, ref, atol=1e-3, rtol=1e-3), \
        float(jnp.max(jnp.abs(out - ref)))

    print("KERNEL_OK")
</pallas_src>

<mosaic_0001>
module attributes {stable_mosaic.version = 11 : i64} {
  func.func @mlp_kernel(%arg0: i32, %arg1: memref<64x32xbf16, #tpu.memory_space<vmem>>, %arg2: memref<32x256xbf16, #tpu.memory_space<vmem>>, %arg3: memref<1x256xf32, #tpu.memory_space<vmem>>, %arg4: memref<256x256xbf16, #tpu.memory_space<vmem>>, %arg5: memref<1x256xf32, #tpu.memory_space<vmem>>, %arg6: memref<256x128xbf16, #tpu.memory_space<vmem>>, %arg7: memref<1x128xf32, #tpu.memory_space<vmem>>, %arg8: memref<64x128xf32, #tpu.memory_space<vmem>>) attributes {dimension_semantics = [#tpu.dimension_semantics<parallel>], iteration_bounds = array<i64: 1>, scalar_prefetch = 0 : i64, scratch_operands = 0 : i64, tpu.core_type = #tpu.core_type<tc>, window_params = [{transform_indices = @transform_0, window_bounds = array<i64: 64, 32>}, {pipeline_mode = #tpu.pipeline_mode<synchronous>, transform_indices = @transform_1, window_bounds = array<i64: 32, 256>}, {pipeline_mode = #tpu.pipeline_mode<synchronous>, transform_indices = @transform_2, window_bounds = array<i64: 1, 256>}, {pipeline_mode = #tpu.pipeline_mode<synchronous>, transform_indices = @transform_3, window_bounds = array<i64: 256, 256>}, {pipeline_mode = #tpu.pipeline_mode<synchronous>, transform_indices = @transform_4, window_bounds = array<i64: 1, 256>}, {pipeline_mode = #tpu.pipeline_mode<synchronous>, transform_indices = @transform_5, window_bounds = array<i64: 256, 128>}, {pipeline_mode = #tpu.pipeline_mode<synchronous>, transform_indices = @transform_6, window_bounds = array<i64: 1, 128>}, {transform_indices = @transform_7, window_bounds = array<i64: 64, 128>}]} {
    %c0 = arith.constant 0 : index
    %c0_0 = arith.constant 0 : index
    %0 = vector.load %arg1[%c0, %c0_0] : memref<64x32xbf16, #tpu.memory_space<vmem>>, vector<64x32xbf16>
    %c0_1 = arith.constant 0 : index
    %c0_2 = arith.constant 0 : index
    %1 = vector.load %arg2[%c0_1, %c0_2] : memref<32x256xbf16, #tpu.memory_space<vmem>>, vector<32x256xbf16>
    %cst = arith.constant dense<0.000000e+00> : vector<64x256xf32>
    %2 = tpu.matmul %0, %1, %cst {dimension_numbers = #tpu.dot_dimension_numbers<[1], [0], [0], [1], [0, 0, 1, 1], [], []>} : vector<64x32xbf16>, vector<32x256xbf16>, vector<64x256xf32> -> vector<64x256xf32>
    %c0_3 = arith.constant 0 : index
    %c0_4 = arith.constant 0 : index
    %3 = vector.load %arg3[%c0_3, %c0_4] : memref<1x256xf32, #tpu.memory_space<vmem>>, vector<1x256xf32>
    %4 = vector.broadcast %3 : vector<1x256xf32> to vector<64x256xf32>
    %5 = arith.addf %2, %4 : vector<64x256xf32>
    %cst_5 = arith.constant 0.000000e+00 : f32
    %6 = vector.broadcast %cst_5 : f32 to vector<64x256xf32>
    %7 = arith.maximumf %5, %6 : vector<64x256xf32>
    %8 = arith.truncf %7 : vector<64x256xf32> to vector<64x256xbf16>
    %c0_6 = arith.constant 0 : index
    %c0_7 = arith.constant 0 : index
    %9 = vector.load %arg4[%c0_6, %c0_7] : memref<256x256xbf16, #tpu.memory_space<vmem>>, vector<256x256xbf16>
    %cst_8 = arith.constant dense<0.000000e+00> : vector<64x256xf32>
    %10 = tpu.matmul %8, %9, %cst_8 {dimension_numbers = #tpu.dot_dimension_numbers<[1], [0], [0], [1], [0, 0, 1, 1], [], []>} : vector<64x256xbf16>, vector<256x256xbf16>, vector<64x256xf32> -> vector<64x256xf32>
    %c0_9 = arith.constant 0 : index
    %c0_10 = arith.constant 0 : index
    %11 = vector.load %arg5[%c0_9, %c0_10] : memref<1x256xf32, #tpu.memory_space<vmem>>, vector<1x256xf32>
    %12 = vector.broadcast %11 : vector<1x256xf32> to vector<64x256xf32>
    %13 = arith.addf %10, %12 : vector<64x256xf32>
    %cst_11 = arith.constant 0.000000e+00 : f32
    %14 = vector.broadcast %cst_11 : f32 to vector<64x256xf32>
    %15 = arith.maximumf %13, %14 : vector<64x256xf32>
    %16 = arith.truncf %15 : vector<64x256xf32> to vector<64x256xbf16>
    %c0_12 = arith.constant 0 : index
    %c0_13 = arith.constant 0 : index
    %17 = vector.load %arg6[%c0_12, %c0_13] : memref<256x128xbf16, #tpu.memory_space<vmem>>, vector<256x128xbf16>
    %cst_14 = arith.constant dense<0.000000e+00> : vector<64x128xf32>
    %18 = tpu.matmul %16, %17, %cst_14 {dimension_numbers = #tpu.dot_dimension_numbers<[1], [0], [0], [1], [0, 0, 1, 1], [], []>} : vector<64x256xbf16>, vector<256x128xbf16>, vector<64x128xf32> -> vector<64x128xf32>
    %c0_15 = arith.constant 0 : index
    %c0_16 = arith.constant 0 : index
    %19 = vector.load %arg7[%c0_15, %c0_16] : memref<1x128xf32, #tpu.memory_space<vmem>>, vector<1x128xf32>
    %20 = vector.broadcast %19 : vector<1x128xf32> to vector<64x128xf32>
    %21 = arith.addf %18, %20 : vector<64x128xf32>
    %c0_17 = arith.constant 0 : index
    %c0_18 = arith.constant 0 : index
    %22 = vector.load %arg8[%c0_17, %c0_18] : memref<64x128xf32, #tpu.memory_space<vmem>>, vector<64x128xf32>
    tpu.vector_store %arg8[%c0_17, %c0_18], %21 {strides = array<i32>} : memref<64x128xf32, #tpu.memory_space<vmem>>, vector<64x128xf32>,
    return
  }
  func.func @transform_0(%arg0: i32) -> (i32, i32) {
    %c0_i32 = arith.constant 0 : i32
    %c0_i32_0 = arith.constant 0 : i32
    return %arg0, %c0_i32 : i32, i32
  }
  func.func @transform_1(%arg0: i32) -> (i32, i32) {
    %c0_i32 = arith.constant 0 : i32
    %c0_i32_0 = arith.constant 0 : i32
    %c0_i32_1 = arith.constant 0 : i32
    return %c0_i32, %c0_i32_0 : i32, i32
  }
  func.func @transform_2(%arg0: i32) -> (i32, i32) {
    %c0_i32 = arith.constant 0 : i32
    %c0_i32_0 = arith.constant 0 : i32
    %c0_i32_1 = arith.constant 0 : i32
    return %c0_i32, %c0_i32_0 : i32, i32
  }
  func.func @transform_3(%arg0: i32) -> (i32, i32) {
    %c0_i32 = arith.constant 0 : i32
    %c0_i32_0 = arith.constant 0 : i32
    %c0_i32_1 = arith.constant 0 : i32
    return %c0_i32, %c0_i32_0 : i32, i32
  }
  func.func @transform_4(%arg0: i32) -> (i32, i32) {
    %c0_i32 = arith.constant 0 : i32
    %c0_i32_0 = arith.constant 0 : i32
    %c0_i32_1 = arith.constant 0 : i32
    return %c0_i32, %c0_i32_0 : i32, i32
  }
  func.func @transform_5(%arg0: i32) -> (i32, i32) {
    %c0_i32 = arith.constant 0 : i32
    %c0_i32_0 = arith.constant 0 : i32
    %c0_i32_1 = arith.constant 0 : i32
    return %c0_i32, %c0_i32_0 : i32, i32
  }
  func.func @transform_6(%arg0: i32) -> (i32, i32) {
    %c0_i32 = arith.constant 0 : i32
    %c0_i32_0 = arith.constant 0 : i32
    %c0_i32_1 = arith.constant 0 : i32
    return %c0_i32, %c0_i32_0 : i32, i32
  }
  func.func @transform_7(%arg0: i32) -> (i32, i32) {
    %c0_i32 = arith.constant 0 : i32
    %c0_i32_0 = arith.constant 0 : i32
    return %arg0, %c0_i32 : i32, i32
  }
}

</mosaic_0001>

<llo_original>
// kernel: tpu_custom_call.1
$region0: #{tpu_custom_call.1}
  #allocation0 [shape = 'u32[]', space=smem, size = 0x4, offset = 0x4, fixed_abs, tag = 'smem constant byte address 0x4 - core index']
  #allocation1 [shape = 'u32[144,128]{1,0:T(1,128)}', space=vmem, size = 0x12000, scoped, tag = 'internal scratch']
  %s0 = inlined_call_operand.vmem [shape: bf16[64,32], index: 0, kind: input, shape index: {}]
  %s1 = inlined_call_operand.vmem [shape: bf16[32,256], index: 1, kind: input, shape index: {}]
  %s2 = inlined_call_operand.vmem [shape: f32[1,256], index: 2, kind: input, shape index: {}]
  %s3 = inlined_call_operand.hbm [shape: bf16[256,256], index: 3, kind: input, shape index: {}]
  %s4 = inlined_call_operand.vmem [shape: f32[1,256], index: 4, kind: input, shape index: {}]
  %s5 = inlined_call_operand.hbm [shape: bf16[256,128], index: 5, kind: input, shape index: {}]
  %s6 = inlined_call_operand.vmem [shape: f32[1,128], index: 6, kind: input, shape index: {}]
  %s7 = inlined_call_operand.hbm [shape: f32[64,128], index: 7, kind: output, shape index: {}]
  %s8 = sld [smem:[#allocation0]]
  $region46: #{tpu_custom_call.1} parent=0
    _
  %s10 = ssub.s32 1, %s8
  %s11 = scalar_select 0, %s10, %s8
  $region1: #{tpu_custom_call.1} parent=0
    #allocation2 [shape = 'u8[131072]{0}', space=vmem, size = 0x20000, scoped, tag = 'input window, operand 3, single buffered']
    #allocation3 [shape = 's32[1]{0}', space=sflag, size = 0x4, scoped, tag = 'scoped memory for tpu_custom_call.1']
    #allocation4 [shape = 's32[1]{0}', space=sflag, size = 0x4, scoped, tag = 'scoped memory for tpu_custom_call.1']
    #allocation5 [shape = 'u8[65536]{0}', space=vmem, size = 0x10000, scoped, tag = 'input window, operand 5, single buffered']
    #allocation6 [shape = 's32[1]{0}', space=sflag, size = 0x4, scoped, tag = 'scoped memory for tpu_custom_call.1']
    #allocation7 [shape = 'u8[32768]{0}', space=vmem, size = 0x8000, scoped, tag = 'output window, operand 0, single buffered']
    %12 = vsyncpa [#allocation3], 0
    %13 = vsyncpa [#allocation6], 0
    %14 = vsyncpa [#allocation4], 0
    // Predicated region
    $region2: #{tpu_custom_call.1} parent=1 // pred_check
      _
    $region3: #{tpu_custom_call.1} parent=1 // pred_check_branch
      %16 = sbr.rel (0) target = $region5
    $region4: #{tpu_custom_call.1} parent=1 // pred_region
      _
    $region5: #{tpu_custom_call.1} parent=1 // pred_fallthru
      _
    // Predicated region
    $region6: #{tpu_custom_call.1} parent=1 // pred_check
      _
    $region7: #{tpu_custom_call.1} parent=1 // pred_check_branch
      %18 = sbr.rel (0) target = $region9
    $region8: #{tpu_custom_call.1} parent=1 // pred_region
      _
    $region9: #{tpu_custom_call.1} parent=1 // pred_fallthru
      _
    // Predicated region
    $region10: #{tpu_custom_call.1} parent=1 // pred_check
      _
    $region11: #{tpu_custom_call.1} parent=1 // pred_check_branch
      %20 = sbr.rel (0) target = $region13
    $region12: #{tpu_custom_call.1} parent=1 // pred_region
      _
    $region13: #{tpu_custom_call.1} parent=1 // pred_fallthru
      _
    // Predicated region
    $region14: #{tpu_custom_call.1} parent=1 // pred_check
      _
    $region15: #{tpu_custom_call.1} parent=1 // pred_check_branch
      %22 = sbr.rel (0) target = $region17
    $region16: #{tpu_custom_call.1} parent=1 // pred_region
      %s24 = ssub.s32 4096, 4096
      %25 = vsyncadd [#allocation3], %s24
      %s26 = sshll.u32 [#allocation2], 4
      %s27 = int_to_ptr.vmem [resolvable:$true] %s26
      %32 = dma.hbm_to_vmem [thread:$0]  %s3, 4096, %s27, [#allocation3], 128, 128, 8
    $region17: #{tpu_custom_call.1} parent=1 // pred_fallthru
      _
    // Predicated region
    $region18: #{tpu_custom_call.1} parent=1 // pred_check
      _
    $region19: #{tpu_custom_call.1} parent=1 // pred_check_branch
      %34 = sbr.rel (0) target = $region21
    $region20: #{tpu_custom_call.1} parent=1 // pred_region
      _
    $region21: #{tpu_custom_call.1} parent=1 // pred_fallthru
      _
    // Predicated region
    $region22: #{tpu_custom_call.1} parent=1 // pred_check
      _
    $region23: #{tpu_custom_call.1} parent=1 // pred_check_branch
      %36 = sbr.rel (0) target = $region25
    $region24: #{tpu_custom_call.1} parent=1 // pred_region
      %s38 = ssub.s32 2048, 2048
      %39 = vsyncadd [#allocation6], %s38
      %s40 = sshll.u32 [#allocation5], 4
      %s41 = int_to_ptr.vmem [resolvable:$true] %s40
      %46 = dma.hbm_to_vmem [thread:$0]  %s5, 2048, %s41, [#allocation6], 64, 64, 4
    $region25: #{tpu_custom_call.1} parent=1 // pred_fallthru
      _
    // Predicated region
    $region26: #{tpu_custom_call.1} parent=1 // pred_check
      _
    $region27: #{tpu_custom_call.1} parent=1 // pred_check_branch
      %48 = sbr.rel (0) target = $region29
    $region28: #{tpu_custom_call.1} parent=1 // pred_region
      _
    $region29: #{tpu_custom_call.1} parent=1 // pred_fallthru
      _
    // Predicated region
    $region30: #{tpu_custom_call.1} parent=1 // pred_check
      _
    $region31: #{tpu_custom_call.1} parent=1 // pred_check_branch
      %50 = sbr.rel (0) target = $region33
    $region32: #{tpu_custom_call.1} parent=1 // pred_region
      %51 = dma.done [#allocation3], 4096
    $region33: #{tpu_custom_call.1} parent=1 // pred_fallthru
      _
    // Predicated region
    $region34: #{tpu_custom_call.1} parent=1 // pred_check
      _
    $region35: #{tpu_custom_call.1} parent=1 // pred_check_branch
      %53 = sbr.rel (0) target = $region37
    $region36: #{tpu_custom_call.1} parent=1 // pred_region
      %54 = dma.done [#allocation6], 2048
    $region37: #{tpu_custom_call.1} parent=1 // pred_fallthru
      _
    %v56 = vld [vmem:[%s0] sm:$0xf]
    %v57 = vld [vmem:[%s0 + $0x4] sm:$0xf]
    %v58 = vld [vmem:[%s0 + $0x8] sm:$0xf]
    %v59 = vld [vmem:[%s0 + $0xc] sm:$0xf]
    %v60 = vld [vmem:[%s0 + $0x10] sm:$0xf]
    %v61 = vld [vmem:[%s0 + $0x14] sm:$0xf]
    %v62 = vld [vmem:[%s0 + $0x18] sm:$0xf]
    %v63 = vld [vmem:[%s0 + $0x1c] sm:$0xf]
    %v64 = vld [vmem:[%s1] sm:$0xff]
    %v65 = vld [vmem:[%s1 + $0x8] sm:$0xff]
    %v66 = vld [vmem:[%s1 + $0x10] sm:$0xff]
    %v67 = vld [vmem:[%s1 + $0x18] sm:$0xff]
    %v68 = vld [vmem:[%s2] sm:$0x3]
    %v70 = vlaneseq
    %v71 = vshrl.u32 %v70, 7
    %v72 = vsub.s32 0, %v71
    %v73 = vrot.slane %v68, %v72
    %v74 = vlaneseq
    %v75 = vshrl.u32 %v74, 7
    %v76 = vsub.s32 1, %v75
    %v77 = vrot.slane %v68, %v76
    %v88 = vunpack.c.l.b16 %v56
    %v89 = vunpack.c.l.b16 %v57
    %v90 = vunpack.c.l.b16 %v58
    %v91 = vunpack.c.l.b16 %v59
    %v92 = vunpack.c.l.b16 %v60
    %v93 = vunpack.c.l.b16 %v61
    %v94 = vunpack.c.l.b16 %v62
    %v95 = vunpack.c.l.b16 %v63
    %v96 = vpack.c.b16 %v89, %v88
    %v97 = vpack.c.b16 %v91, %v90
    %v98 = vpack.c.b16 %v93, %v92
    %v99 = vpack.c.b16 %v95, %v94
    %v104 = vunpack.c.l.b16 %v64
    %v105 = vunpack.c.h.b16 %v64
    %v106 = vunpack.c.l.b16 %v65
    %v107 = vunpack.c.h.b16 %v65
    %v108 = vunpack.c.l.b16 %v66
    %v109 = vunpack.c.h.b16 %v66
    %v110 = vunpack.c.l.b16 %v67
    %v111 = vunpack.c.h.b16 %v67
    %v112 = vpack.c.b16 %v106, %v104
    %v113 = vpack.c.b16 %v107, %v105
    %v114 = vpack.c.b16 %v110, %v108
    %v115 = vpack.c.b16 %v111, %v109
    %vm120 = vcmask 261120
    %v122 = vsel %vm120, %v96, 0
    %v125 = vsel %vm120, %v97, 0
    %v128 = vsel %vm120, %v98, 0
    %v131 = vsel %vm120, %v99, 0
    %133 = vmatprep.subr.bf16.mxu0 0
    %134 = vmatpush1.bf16.msra.mxu0 0
    %135 = vmatprep.subr.bf16.mxu0 0
    %136 = vmatpush1.bf16.msra.mxu0 0
    %137 = vmatprep.subr.bf16.mxu0 0
    %138 = vmatpush1.bf16.msra.mxu0 0
    %139 = vmatprep.subr.bf16.mxu0 0
    %140 = vmatpush1.bf16.msra.mxu0 0
    %141 = vmatprep.subr.bf16.mxu0 0
    %142 = vmatpush1.bf16.msra.mxu0 0
    %143 = vmatprep.subr.bf16.mxu0 0
    %144 = vmatpush1.bf16.msra.mxu0 0
    %145 = vmatprep.subr.bf16.mxu0 %v115
    %146 = vmatpush1.bf16.msra.mxu0 %v114
    %147 = vmatprep.subr.bf16.mxu0 %v113
    %148 = vmatpush1.bf16.msra.mxu0 %v112
    %149 = vmatprep.subr.bf16.mxu0 0
    %150 = vmatpush2.bf16.msra.mxu0 0
    %151 = vmatprep.subr.bf16.mxu0 0
    %152 = vmatpush2.bf16.msra.mxu0 0
    %153 = vmatprep.subr.bf16.mxu0 0
    %154 = vmatpush2.bf16.msra.mxu0 0
    %155 = vmatprep.subr.bf16.mxu0 0
    %156 = vmatpush2.bf16.msra.mxu0 0
    %157 = vmatprep.subr.bf16.mxu0 0
    %158 = vmatpush2.bf16.msra.mxu0 0
    %159 = vmatprep.subr.bf16.mxu0 0
    %160 = vmatpush2.bf16.msra.mxu0 0
    %161 = vmatprep.subr.bf16.mxu0 0
    %162 = vmatpush2.bf16.msra.mxu0 0
    %163 = vmatprep.subr.bf16.mxu0 0
    %164 = vmatpush2.bf16.msra.mxu0 0
    %165 = vmatprep.mubr.bf16.mxu0 0
    %166 = vmatmul.mubr.bf16.gmra.mxu0 %v122
    %v167 = vpop.f32.mrf.mxu0
    %v168 = vadd.f32 %v73, %v167
    %v169 = vpop.f32.mrf.mxu0
    %v170 = vadd.f32 %v77, %v169
    %v171 = vpop.f32.mrf.mxu0
    %v172 = vadd.f32 %v73, %v171
    %v173 = vpop.f32.mrf.mxu0
    %v174 = vadd.f32 %v77, %v173
    %175 = vmatprep.mubr.bf16.mxu0 0
    %176 = vmatmul.mubr.bf16.gmra.mxu0 %v125
    %v177 = vpop.f32.mrf.mxu0
    %v178 = vadd.f32 %v73, %v177
    %v179 = vpop.f32.mrf.mxu0
    %v180 = vadd.f32 %v77, %v179
    %v181 = vpop.f32.mrf.mxu0
    %v182 = vadd.f32 %v73, %v181
    %v183 = vpop.f32.mrf.mxu0
    %v184 = vadd.f32 %v77, %v183
    %185 = vmatprep.mubr.bf16.mxu0 0
    %186 = vmatmul.mubr.bf16.gmra.mxu0 %v128
    %v187 = vpop.f32.mrf.mxu0
    %v188 = vadd.f32 %v73, %v187
    %v189 = vpop.f32.mrf.mxu0
    %v190 = vadd.f32 %v77, %v189
    %v191 = vpop.f32.mrf.mxu0
    %v192 = vadd.f32 %v73, %v191
    %v193 = vpop.f32.mrf.mxu0
    %v194 = vadd.f32 %v77, %v193
    %195 = vmatprep.mubr.bf16.mxu0 0
    %196 = vmatmul.mubr.bf16.gmra.mxu0 %v131
    %v197 = vpop.f32.mrf.mxu0
    %v198 = vadd.f32 %v73, %v197
    %v199 = vpop.f32.mrf.mxu0
    %v200 = vadd.f32 %v77, %v199
    %v201 = vpop.f32.mrf.mxu0
    %v202 = vadd.f32 %v73, %v201
    %v203 = vpop.f32.mrf.mxu0
    %v204 = vadd.f32 %v77, %v203
    %205 = vdwg.mxu0
    %v206 = vmax.f32 %v168, 0.0
    %v207 = vmax.f32 %v170, 0.0
    %v208 = vmax.f32 %v172, 0.0
    %v209 = vmax.f32 %v174, 0.0
    %v210 = vmax.f32 %v178, 0.0
    %v211 = vmax.f32 %v180, 0.0
    %v212 = vmax.f32 %v182, 0.0
    %v213 = vmax.f32 %v184, 0.0
    %v214 = vmax.f32 %v188, 0.0
    %v215 = vmax.f32 %v190, 0.0
    %v216 = vmax.f32 %v192, 0.0
    %v217 = vmax.f32 %v194, 0.0
    %v218 = vmax.f32 %v198, 0.0
    %v219 = vmax.f32 %v200, 0.0
    %v220 = vmax.f32 %v202, 0.0
    %v221 = vmax.f32 %v204, 0.0
    %v222 = vpack.c.bf16 %v208, %v206
    %v223 = vpack.c.bf16 %v209, %v207
    %v224 = vpack.c.bf16 %v212, %v210
    %v225 = vpack.c.bf16 %v213, %v211
    %v226 = vpack.c.bf16 %v216, %v214
    %v227 = vpack.c.bf16 %v217, %v215
    %v228 = vpack.c.bf16 %v220, %v218
    %v229 = vpack.c.bf16 %v221, %v219
    %v230 = vld [vmem:[#allocation2] sm:$0xff]
    %v231 = vld [vmem:[#allocation2 + $0x8] sm:$0xff]
    %v232 = vld [vmem:[#allocation2 + $0x10] sm:$0xff]
    %v233 = vld [vmem:[#allocation2 + $0x18] sm:$0xff]
    %v234 = vld [vmem:[#allocation2 + $0x20] sm:$0xff]
    %v235 = vld [vmem:[#allocation2 + $0x28] sm:$0xff]
    %v236 = vld [vmem:[#allocation2 + $0x30] sm:$0xff]
    %v237 = vld [vmem:[#allocation2 + $0x38] sm:$0xff]
    %v238 = vld [vmem:[#allocation2 + $0x40] sm:$0xff]
    %v239 = vld [vmem:[#allocation2 + $0x48] sm:$0xff]
    %v240 = vld [vmem:[#allocation2 + $0x50] sm:$0xff]
    %v241 = vld [vmem:[#allocation2 + $0x58] sm:$0xff]
    %v242 = vld [vmem:[#allocation2 + $0x60] sm:$0xff]
    %v243 = vld [vmem:[#allocation2 + $0x68] sm:$0xff]
    %v244 = vld [vmem:[#allocation2 + $0x70] sm:$0xff]
    %v245 = vld [vmem:[#allocation2 + $0x78] sm:$0xff]
    %v246 = vld [vmem:[#allocation2 + $0x80] sm:$0xff]
    %v247 = vld [vmem:[#allocation2 + $0x88] sm:$0xff]
    %v248 = vld [vmem:[#allocation2 + $0x90] sm:$0xff]
    %v249 = vld [vmem:[#allocation2 + $0x98] sm:$0xff]
    %v250 = vld [vmem:[#allocation2 + $0xa0] sm:$0xff]
    %v251 = vld [vmem:[#allocation2 + $0xa8] sm:$0xff]
    %v252 = vld [vmem:[#allocation2 + $0xb0] sm:$0xff]
    %v253 = vld [vmem:[#allocation2 + $0xb8] sm:$0xff]
    %v254 = vld [vmem:[#allocation2 + $0xc0] sm:$0xff]
    %v255 = vld [vmem:[#allocation2 + $0xc8] sm:$0xff]
    %v256 = vld [vmem:[#allocation2 + $0xd0] sm:$0xff]
    %v257 = vld [vmem:[#allocation2 + $0xd8] sm:$0xff]
    %v258 = vld [vmem:[#allocation2 + $0xe0] sm:$0xff]
    %v259 = vld [vmem:[#allocation2 + $0xe8] sm:$0xff]
    %v260 = vld [vmem:[#allocation2 + $0xf0] sm:$0xff]
    %v261 = vld [vmem:[#allocation2 + $0xf8] sm:$0xff]
    %v262 = vld [vmem:[%s4] sm:$0x3]
    %v264 = vlaneseq
    %v265 = vshrl.u32 %v264, 7
    %v266 = vsub.s32 0, %v265
    %v267 = vrot.slane %v262, %v266
    %v268 = vlaneseq
    %v269 = vshrl.u32 %v268, 7
    %v270 = vsub.s32 1, %v269
    %v271 = vrot.slane %v262, %v270
    %v306 = vunpack.c.l.b16 %v230
    %v307 = vunpack.c.h.b16 %v230
    %v308 = vunpack.c.l.b16 %v231
    %v309 = vunpack.c.h.b16 %v231
    %v310 = vunpack.c.l.b16 %v232
    %v311 = vunpack.c.h.b16 %v232
    %v312 = vunpack.c.l.b16 %v233
    %v313 = vunpack.c.h.b16 %v233
    %v314 = vunpack.c.l.b16 %v234
    %v315 = vunpack.c.h.b16 %v234
    %v316 = vunpack.c.l.b16 %v235
    %v317 = vunpack.c.h.b16 %v235
    %v318 = vunpack.c.l.b16 %v236
    %v319 = vunpack.c.h.b16 %v236
    %v320 = vunpack.c.l.b16 %v237
    %v321 = vunpack.c.h.b16 %v237
    %v322 = vunpack.c.l.b16 %v238
    %v323 = vunpack.c.h.b16 %v238
    %v324 = vunpack.c.l.b16 %v239
    %v325 = vunpack.c.h.b16 %v239
    %v326 = vunpack.c.l.b16 %v240
    %v327 = vunpack.c.h.b16 %v240
    %v328 = vunpack.c.l.b16 %v241
    %v329 = vunpack.c.h.b16 %v241
    %v330 = vunpack.c.l.b16 %v242
    %v331 = vunpack.c.h.b16 %v242
    %v332 = vunpack.c.l.b16 %v243
    %v333 = vunpack.c.h.b16 %v243
    %v334 = vunpack.c.l.b16 %v244
    %v335 = vunpack.c.h.b16 %v244
    %v336 = vunpack.c.l.b16 %v245
    %v337 = vunpack.c.h.b16 %v245
    %v338 = vunpack.c.l.b16 %v246
    %v339 = vunpack.c.h.b16 %v246
    %v340 = vunpack.c.l.b16 %v247
    %v341 = vunpack.c.h.b16 %v247
    %v342 = vunpack.c.l.b16 %v248
    %v343 = vunpack.c.h.b16 %v248
    %v344 = vunpack.c.l.b16 %v249
    %v345 = vunpack.c.h.b16 %v249
    %v346 = vunpack.c.l.b16 %v250
    %v347 = vunpack.c.h.b16 %v250
    %v348 = vunpack.c.l.b16 %v251
    %v349 = vunpack.c.h.b16 %v251
    %v350 = vunpack.c.l.b16 %v252
    %v351 = vunpack.c.h.b16 %v252
    %v352 = vunpack.c.l.b16 %v253
    %v353 = vunpack.c.h.b16 %v253
    %v354 = vunpack.c.l.b16 %v254
    %v355 = vunpack.c.h.b16 %v254
    %v356 = vunpack.c.l.b16 %v255
    %v357 = vunpack.c.h.b16 %v255
    %v358 = vunpack.c.l.b16 %v256
    %v359 = vunpack.c.h.b16 %v256
    %v360 = vunpack.c.l.b16 %v257
    %v361 = vunpack.c.h.b16 %v257
    %v362 = vunpack.c.l.b16 %v258
    %v363 = vunpack.c.h.b16 %v258
    %v364 = vunpack.c.l.b16 %v259
    %v365 = vunpack.c.h.b16 %v259
    %v366 = vunpack.c.l.b16 %v260
    %v367 = vunpack.c.h.b16 %v260
    %v368 = vunpack.c.l.b16 %v261
    %v369 = vunpack.c.h.b16 %v261
    %v370 = vpack.c.b16 %v308, %v306
    %v371 = vpack.c.b16 %v309, %v307
    %v372 = vpack.c.b16 %v312, %v310
    %v373 = vpack.c.b16 %v313, %v311
    %v374 = vpack.c.b16 %v316, %v314
    %v375 = vpack.c.b16 %v317, %v315
    %v376 = vpack.c.b16 %v320, %v318
    %v377 = vpack.c.b16 %v321, %v319
    %v378 = vpack.c.b16 %v324, %v322
    %v379 = vpack.c.b16 %v325, %v323
    %v380 = vpack.c.b16 %v328, %v326
    %v381 = vpack.c.b16 %v329, %v327
    %v382 = vpack.c.b16 %v332, %v330
    %v383 = vpack.c.b16 %v333, %v331
    %v384 = vpack.c.b16 %v336, %v334
    %v385 = vpack.c.b16 %v337, %v335
    %v386 = vpack.c.b16 %v340, %v338
    %v387 = vpack.c.b16 %v341, %v339
    %v388 = vpack.c.b16 %v344, %v342
    %v389 = vpack.c.b16 %v345, %v343
    %v390 = vpack.c.b16 %v348, %v346
    %v391 = vpack.c.b16 %v349, %v347
    %v392 = vpack.c.b16 %v352, %v350
    %v393 = vpack.c.b16 %v353, %v351
    %v394 = vpack.c.b16 %v356, %v354
    %v395 = vpack.c.b16 %v357, %v355
    %v396 = vpack.c.b16 %v360, %v358
    %v397 = vpack.c.b16 %v361, %v359
    %v398 = vpack.c.b16 %v364, %v362
    %v399 = vpack.c.b16 %v365, %v363
    %v400 = vpack.c.b16 %v368, %v366
    %v401 = vpack.c.b16 %v369, %v367
    %434 = vmatprep.subr.bf16.mxu0 %v385
    %435 = vmatpush1.bf16.msra.mxu0 %v384
    %436 = vmatprep.subr.bf16.mxu0 %v383
    %437 = vmatpush1.bf16.msra.mxu0 %v382
    %438 = vmatprep.subr.bf16.mxu0 %v381
    %439 = vmatpush1.bf16.msra.mxu0 %v380
    %440 = vmatprep.subr.bf16.mxu0 %v379
    %441 = vmatpush1.bf16.msra.mxu0 %v378
    %442 = vmatprep.subr.bf16.mxu0 %v377
    %443 = vmatpush1.bf16.msra.mxu0 %v376
    %444 = vmatprep.subr.bf16.mxu0 %v375
    %445 = vmatpush1.bf16.msra.mxu0 %v374
    %446 = vmatprep.subr.bf16.mxu0 %v373
    %447 = vmatpush1.bf16.msra.mxu0 %v372
    %448 = vmatprep.subr.bf16.mxu0 %v371
    %449 = vmatpush1.bf16.msra.mxu0 %v370
    %450 = vmatprep.subr.bf16.mxu0 %v401
    %451 = vmatpush2.bf16.msra.mxu0 %v400
    %452 = vmatprep.subr.bf16.mxu0 %v399
    %453 = vmatpush2.bf16.msra.mxu0 %v398
    %454 = vmatprep.subr.bf16.mxu0 %v397
    %455 = vmatpush2.bf16.msra.mxu0 %v396
    %456 = vmatprep.subr.bf16.mxu0 %v395
    %457 = vmatpush2.bf16.msra.mxu0 %v394
    %458 = vmatprep.subr.bf16.mxu0 %v393
    %459 = vmatpush2.bf16.msra.mxu0 %v392
    %460 = vmatprep.subr.bf16.mxu0 %v391
    %461 = vmatpush2.bf16.msra.mxu0 %v390
    %462 = vmatprep.subr.bf16.mxu0 %v389
    %463 = vmatpush2.bf16.msra.mxu0 %v388
    %464 = vmatprep.subr.bf16.mxu0 %v387
    %465 = vmatpush2.bf16.msra.mxu0 %v386
    %466 = vmatprep.mubr.bf16.mxu0 %v223
    %467 = vmatmul.mubr.bf16.gmra.mxu0 %v222
    %v468 = vpop.f32.mrf.mxu0
    %v469 = vadd.f32 %v267, %v468
    %v470 = vpop.f32.mrf.mxu0
    %v471 = vadd.f32 %v271, %v470
    %v472 = vpop.f32.mrf.mxu0
    %v473 = vadd.f32 %v267, %v472
    %v474 = vpop.f32.mrf.mxu0
    %v475 = vadd.f32 %v271, %v474
    %476 = vmatprep.mubr.bf16.mxu0 %v225
    %477 = vmatmul.mubr.bf16.gmra.mxu0 %v224
    %v478 = vpop.f32.mrf.mxu0
    %v479 = vadd.f32 %v267, %v478
    %v480 = vpop.f32.mrf.mxu0
    %v481 = vadd.f32 %v271, %v480
    %v482 = vpop.f32.mrf.mxu0
    %v483 = vadd.f32 %v267, %v482
    %v484 = vpop.f32.mrf.mxu0
    %v485 = vadd.f32 %v271, %v484
    %486 = vmatprep.mubr.bf16.mxu0 %v227
    %487 = vmatmul.mubr.bf16.gmra.mxu0 %v226
    %v488 = vpop.f32.mrf.mxu0
    %v489 = vadd.f32 %v267, %v488
    %v490 = vpop.f32.mrf.mxu0
    %v491 = vadd.f32 %v271, %v490
    %v492 = vpop.f32.mrf.mxu0
    %v493 = vadd.f32 %v267, %v492
    %v494 = vpop.f32.mrf.mxu0
    %v495 = vadd.f32 %v271, %v494
    %496 = vmatprep.mubr.bf16.mxu0 %v229
    %497 = vmatmul.mubr.bf16.gmra.mxu0 %v228
    %v498 = vpop.f32.mrf.mxu0
    %v499 = vadd.f32 %v267, %v498
    %v500 = vpop.f32.mrf.mxu0
    %v501 = vadd.f32 %v271, %v500
    %v502 = vpop.f32.mrf.mxu0
    %v503 = vadd.f32 %v267, %v502
    %v504 = vpop.f32.mrf.mxu0
    %v505 = vadd.f32 %v271, %v504
    %506 = vdwg.mxu0
    %v507 = vmax.f32 %v469, 0.0
    %v508 = vmax.f32 %v471, 0.0
    %v509 = vmax.f32 %v473, 0.0
    %v510 = vmax.f32 %v475, 0.0
    %v511 = vmax.f32 %v479, 0.0
    %v512 = vmax.f32 %v481, 0.0
    %v513 = vmax.f32 %v483, 0.0
    %v514 = vmax.f32 %v485, 0.0
    %v515 = vmax.f32 %v489, 0.0
    %v516 = vmax.f32 %v491, 0.0
    %v517 = vmax.f32 %v493, 0.0
    %v518 = vmax.f32 %v495, 0.0
    %v519 = vmax.f32 %v499, 0.0
    %v520 = vmax.f32 %v501, 0.0
    %v521 = vmax.f32 %v503, 0.0
    %v522 = vmax.f32 %v505, 0.0
    %v523 = vpack.c.bf16 %v509, %v507
    %v524 = vpack.c.bf16 %v510, %v508
    %v525 = vpack.c.bf16 %v513, %v511
    %v526 = vpack.c.bf16 %v514, %v512
    %v527 = vpack.c.bf16 %v517, %v515
    %v528 = vpack.c.bf16 %v518, %v516
    %v529 = vpack.c.bf16 %v521, %v519
    %v530 = vpack.c.bf16 %v522, %v520
    %v531 = vld [vmem:[#allocation5] sm:$0xf]
    %v532 = vld [vmem:[#allocation5 + $0x4] sm:$0xf]
    %v533 = vld [vmem:[#allocation5 + $0x8] sm:$0xf]
    %v534 = vld [vmem:[#allocation5 + $0xc] sm:$0xf]
    %v535 = vld [vmem:[#allocation5 + $0x10] sm:$0xf]
    %v536 = vld [vmem:[#allocation5 + $0x14] sm:$0xf]
    %v537 = vld [vmem:[#allocation5 + $0x18] sm:$0xf]
    %v538 = vld [vmem:[#allocation5 + $0x1c] sm:$0xf]
    %v539 = vld [vmem:[#allocation5 + $0x20] sm:$0xf]
    %v540 = vld [vmem:[#allocation5 + $0x24] sm:$0xf]
    %v541 = vld [vmem:[#allocation5 + $0x28] sm:$0xf]
    %v542 = vld [vmem:[#allocation5 + $0x2c] sm:$0xf]
    %v543 = vld [vmem:[#allocation5 + $0x30] sm:$0xf]
    %v544 = vld [vmem:[#allocation5 + $0x34] sm:$0xf]
    %v545 = vld [vmem:[#allocation5 + $0x38] sm:$0xf]
    %v546 = vld [vmem:[#allocation5 + $0x3c] sm:$0xf]
    %v547 = vld [vmem:[#allocation5 + $0x40] sm:$0xf]
    %v548 = vld [vmem:[#allocation5 + $0x44] sm:$0xf]
    %v549 = vld [vmem:[#allocation5 + $0x48] sm:$0xf]
    %v550 = vld [vmem:[#allocation5 + $0x4c] sm:$0xf]
    %v551 = vld [vmem:[#allocation5 + $0x50] sm:$0xf]
    %v552 = vld [vmem:[#allocation5 + $0x54] sm:$0xf]
    %v553 = vld [vmem:[#allocation5 + $0x58] sm:$0xf]
    %v554 = vld [vmem:[#allocation5 + $0x5c] sm:$0xf]
    %v555 = vld [vmem:[#allocation5 + $0x60] sm:$0xf]
    %v556 = vld [vmem:[#allocation5 + $0x64] sm:$0xf]
    %v557 = vld [vmem:[#allocation5 + $0x68] sm:$0xf]
    %v558 = vld [vmem:[#allocation5 + $0x6c] sm:$0xf]
    %v559 = vld [vmem:[#allocation5 + $0x70] sm:$0xf]
    %v560 = vld [vmem:[#allocation5 + $0x74] sm:$0xf]
    %v561 = vld [vmem:[#allocation5 + $0x78] sm:$0xf]
    %v562 = vld [vmem:[#allocation5 + $0x7c] sm:$0xf]
    %v563 = vld [vmem:[%s6] sm:$0x1]
    %v565 = vlaneseq
    %v566 = vshrl.u32 %v565, 7
    %v567 = vsub.s32 0, %v566
    %v568 = vrot.slane %v563, %v567
    %v602 = vunpack.c.l.b16 %v531
    %v603 = vunpack.c.l.b16 %v532
    %v604 = vunpack.c.l.b16 %v533
    %v605 = vunpack.c.l.b16 %v534
    %v606 = vunpack.c.l.b16 %v535
    %v607 = vunpack.c.l.b16 %v536
    %v608 = vunpack.c.l.b16 %v537
    %v609 = vunpack.c.l.b16 %v538
    %v610 = vunpack.c.l.b16 %v539
    %v611 = vunpack.c.l.b16 %v540
    %v612 = vunpack.c.l.b16 %v541
    %v613 = vunpack.c.l.b16 %v542
    %v614 = vunpack.c.l.b16 %v543
    %v615 = vunpack.c.l.b16 %v544
    %v616 = vunpack.c.l.b16 %v545
    %v617 = vunpack.c.l.b16 %v546
    %v618 = vunpack.c.l.b16 %v547
    %v619 = vunpack.c.l.b16 %v548
    %v620 = vunpack.c.l.b16 %v549
    %v621 = vunpack.c.l.b16 %v550
    %v622 = vunpack.c.l.b16 %v551
    %v623 = vunpack.c.l.b16 %v552
    %v624 = vunpack.c.l.b16 %v553
    %v625 = vunpack.c.l.b16 %v554
    %v626 = vunpack.c.l.b16 %v555
    %v627 = vunpack.c.l.b16 %v556
    %v628 = vunpack.c.l.b16 %v557
    %v629 = vunpack.c.l.b16 %v558
    %v630 = vunpack.c.l.b16 %v559
    %v631 = vunpack.c.l.b16 %v560
    %v632 = vunpack.c.l.b16 %v561
    %v633 = vunpack.c.l.b16 %v562
    %v634 = vpack.c.b16 %v603, %v602
    %v635 = vpack.c.b16 %v605, %v604
    %v636 = vpack.c.b16 %v607, %v606
    %v637 = vpack.c.b16 %v609, %v608
    %v638 = vpack.c.b16 %v611, %v610
    %v639 = vpack.c.b16 %v613, %v612
    %v640 = vpack.c.b16 %v615, %v614
    %v641 = vpack.c.b16 %v617, %v616
    %v642 = vpack.c.b16 %v619, %v618
    %v643 = vpack.c.b16 %v621, %v620
    %v644 = vpack.c.b16 %v623, %v622
    %v645 = vpack.c.b16 %v625, %v624
    %v646 = vpack.c.b16 %v627, %v626
    %v647 = vpack.c.b16 %v629, %v628
    %v648 = vpack.c.b16 %v631, %v630
    %v649 = vpack.c.b16 %v633, %v632
    %666 = vmatprep.subr.bf16.mxu0 0
    %667 = vmatpush1.bf16.msra.mxu0 %v641
    %668 = vmatprep.subr.bf16.mxu0 0
    %669 = vmatpush1.bf16.msra.mxu0 %v640
    %670 = vmatprep.subr.bf16.mxu0 0
    %671 = vmatpush1.bf16.msra.mxu0 %v639
    %672 = vmatprep.subr.bf16.mxu0 0
    %673 = vmatpush1.bf16.msra.mxu0 %v638
    %674 = vmatprep.subr.bf16.mxu0 0
    %675 = vmatpush1.bf16.msra.mxu0 %v637
    %676 = vmatprep.subr.bf16.mxu0 0
    %677 = vmatpush1.bf16.msra.mxu0 %v636
    %678 = vmatprep.subr.bf16.mxu0 0
    %679 = vmatpush1.bf16.msra.mxu0 %v635
    %680 = vmatprep.subr.bf16.mxu0 0
    %681 = vmatpush1.bf16.msra.mxu0 %v634
    %682 = vmatprep.subr.bf16.mxu0 0
    %683 = vmatpush2.bf16.msra.mxu0 %v649
    %684 = vmatprep.subr.bf16.mxu0 0
    %685 = vmatpush2.bf16.msra.mxu0 %v648
    %686 = vmatprep.subr.bf16.mxu0 0
    %687 = vmatpush2.bf16.msra.mxu0 %v647
    %688 = vmatprep.subr.bf16.mxu0 0
    %689 = vmatpush2.bf16.msra.mxu0 %v646
    %690 = vmatprep.subr.bf16.mxu0 0
    %691 = vmatpush2.bf16.msra.mxu0 %v645
    %692 = vmatprep.subr.bf16.mxu0 0
    %693 = vmatpush2.bf16.msra.mxu0 %v644
    %694 = vmatprep.subr.bf16.mxu0 0
    %695 = vmatpush2.bf16.msra.mxu0 %v643
    %696 = vmatprep.subr.bf16.mxu0 0
    %697 = vmatpush2.bf16.msra.mxu0 %v642
    %698 = vmatprep.mubr.bf16.mxu0 %v524
    %699 = vmatmul.mubr.bf16.gmra.mxu0 %v523
    %v700 = vpop.f32.mrf.mxu0
    %v701 = vadd.f32 %v568, %v700
    %v702 = vpop.f32.mrf.mxu0
    %v703 = vpop.f32.mrf.mxu0
    %v704 = vadd.f32 %v568, %v703
    %v705 = vpop.f32.mrf.mxu0
    %706 = vmatprep.mubr.bf16.mxu0 %v526
    %707 = vmatmul.mubr.bf16.gmra.mxu0 %v525
    %v708 = vpop.f32.mrf.mxu0
    %v709 = vadd.f32 %v568, %v708
    %v710 = vpop.f32.mrf.mxu0
    %v711 = vpop.f32.mrf.mxu0
    %v712 = vadd.f32 %v568, %v711
    %v713 = vpop.f32.mrf.mxu0
    %714 = vmatprep.mubr.bf16.mxu0 %v528
    %715 = vmatmul.mubr.bf16.gmra.mxu0 %v527
    %v716 = vpop.f32.mrf.mxu0
    %v717 = vadd.f32 %v568, %v716
    %v718 = vpop.f32.mrf.mxu0
    %v719 = vpop.f32.mrf.mxu0
    %v720 = vadd.f32 %v568, %v719
    %v721 = vpop.f32.mrf.mxu0
    %722 = vmatprep.mubr.bf16.mxu0 %v530
    %723 = vmatmul.mubr.bf16.gmra.mxu0 %v529
    %v724 = vpop.f32.mrf.mxu0
    %v725 = vadd.f32 %v568, %v724
    %v726 = vpop.f32.mrf.mxu0
    %v727 = vpop.f32.mrf.mxu0
    %v728 = vadd.f32 %v568, %v727
    %v729 = vpop.f32.mrf.mxu0
    %730 = vdwg.mxu0
    %731 = vst [vmem:[#allocation7] sm:$0xff] %v701
    %732 = vst [vmem:[#allocation7 + $0x8] sm:$0xff] %v704
    %733 = vst [vmem:[#allocation7 + $0x10] sm:$0xff] %v709
    %734 = vst [vmem:[#allocation7 + $0x18] sm:$0xff] %v712
    %735 = vst [vmem:[#allocation7 + $0x20] sm:$0xff] %v717
    %736 = vst [vmem:[#allocation7 + $0x28] sm:$0xff] %v720
    %737 = vst [vmem:[#allocation7 + $0x30] sm:$0xff] %v725
    %738 = vst [vmem:[#allocation7 + $0x38] sm:$0xff] %v728
    // Predicated region
    $region38: #{tpu_custom_call.1} parent=1 // pred_check
      _
    $region39: #{tpu_custom_call.1} parent=1 // pred_check_branch
      %740 = sbr.rel (0) target = $region41
    $region40: #{tpu_custom_call.1} parent=1 // pred_region
      %s742 = ssub.s32 1024, 1024
      %743 = vsyncadd [#allocation4], %s742
      %s744 = sshll.u32 [#allocation7], 4
      %s745 = int_to_ptr.vmem [resolvable:$true] %s744
      %750 = dma.vmem_to_hbm [thread:$0]  %s745, 1024, %s7, [#allocation4], 128, 128, 8
    $region41: #{tpu_custom_call.1} parent=1 // pred_fallthru
      _
    // Predicated region
    $region42: #{tpu_custom_call.1} parent=1 // pred_check
      _
    $region43: #{tpu_custom_call.1} parent=1 // pred_check_branch
      %752 = sbr.rel (0) target = $region45
    $region44: #{tpu_custom_call.1} parent=1 // pred_region
      %753 = dma.done [#allocation4], 1024
    $region45: #{tpu_custom_call.1} parent=1 // pred_fallthru
      _
    %754 = vsyncpa [#allocation3], 1
    %755 = vsyncpa [#allocation6], 1
    %756 = vsyncpa [#allocation4], 1

</llo_original>
